<compile_context>
chip_gen: v7x
topology: tpu7x:2x2x1
jax: 0.10.0
libtpu: 0.0.40
codegen_flags: <defaults>
</compile_context>

<pallas_src>
import math
import functools

import jax
import jax.numpy as jnp
from jax import lax
from jax.experimental import pallas as pl
from jax.experimental.pallas import tpu as pltpu


# ----------------------------- tiling helper -----------------------------------------

def _pick_tile(dim, target):
    """Largest multiple-of-8 tile <= target that divides dim; else the full dim."""
    if dim <= target:
        return dim
    t = (target // 8) * 8
    while t >= 8:
        if dim % t == 0:
            return t
        t -= 8
    return dim


# ----------------------------- Linear projection kernel ------------------------------

def _linear_kernel(x_ref, w_ref, b_ref, o_ref):
    # Native-dtype operands on the MXU, f32 accumulation only.
    y = jnp.dot(x_ref[...], w_ref[...], preferred_element_type=jnp.float32)
    o_ref[...] = (y + b_ref[...]).astype(o_ref.dtype)


def pallas_linear(x2d, w, b, *, row_tile=256):
    """y = x2d @ w + b, with x2d: [M, K], w: [K, N], b: [N].

    Rows are tiled so BlockSpec double-buffering overlaps HBM traffic with the
    MXU; the weight/bias blocks stay resident across the grid.
    """
    M, K = x2d.shape
    K2, N = w.shape
    assert K == K2
    tm = _pick_tile(M, row_tile)
    return pl.pallas_call(
        _linear_kernel,
        grid=(pl.cdiv(M, tm),),
        in_specs=[
            pl.BlockSpec((tm, K), lambda i: (i, 0)),   # streamed row tiles
            pl.BlockSpec((K, N), lambda i: (0, 0)),    # resident weight
            pl.BlockSpec((1, N), lambda i: (0, 0)),    # resident bias
        ],
        out_specs=pl.BlockSpec((tm, N), lambda i: (i, 0)),
        out_shape=jax.ShapeDtypeStruct((M, N), x2d.dtype),
        compiler_params=pltpu.CompilerParams(dimension_semantics=("parallel",)),
    )(x2d, w, b.reshape(1, N))


# ----------------------------- Fused attention kernel --------------------------------

def _attn_kernel(q_ref, k_ref, v_ref, o_ref, a_ref, *, n_heads, d_head, scale):
    # q_ref: [tq, H*D], k_ref/v_ref: [LK, H*D] (all heads packed per block),
    # o_ref: [tq, H*D], a_ref: [H, tq, LK].
    q = q_ref[...] * scale            # fold 1/sqrt(D) into Q (LQ*H*D elements)
    k = k_ref[...]
    v = v_ref[...]

    outs = []
    # H is small and static -> unrolled per-head 2-D matmuls (static lane slices).
    for h in range(n_heads):
        lo, hi = h * d_head, (h + 1) * d_head
        # scores = Q_h K_h^T, contracting the last dims (no explicit transpose).
        s = lax.dot_general(
            q[:, lo:hi], k[:, lo:hi],
            dimension_numbers=(((1,), (1,)), ((), ())),
            preferred_element_type=jnp.float32)                       # [tq, LK]
        # numerically stable softmax over keys
        s = s - jnp.max(s, axis=-1, keepdims=True)
        p = jnp.exp(s)
        p = p * pl.reciprocal(jnp.sum(p, axis=-1, keepdims=True), approx=True)
        a_ref[h, :, :] = p.astype(a_ref.dtype)
        # out_h = P V_h (P fed to the MXU in V's dtype, f32 accumulate)
        outs.append(lax.dot_general(
            p.astype(v.dtype), v[:, lo:hi],
            dimension_numbers=(((1,), (0,)), ((), ())),
            preferred_element_type=jnp.float32))                      # [tq, D]

    o_ref[...] = jnp.concatenate(outs, axis=-1).astype(o_ref.dtype)   # [tq, H*D]


def pallas_full_attention(q, k, v, n_heads, d_head, *, q_tile=128):
    """q: [B, LQ, H*D], k/v: [B, LK, H*D] -> (out [B, LQ, H*D], attn [B, H, LQ, LK]).

    Grid = (batch, q-tiles); all heads are processed per block so the loads stay
    lane-dense even for small head dims.  K/V blocks are reused across q tiles.
    """
    B, LQ, HD = q.shape
    _, LK, _ = k.shape
    assert k.shape == v.shape, "inner attention requires len(keys) == len(values)"
    assert HD == n_heads * d_head

    tq = _pick_tile(LQ, q_tile)
    kernel = functools.partial(_attn_kernel, n_heads=n_heads, d_head=d_head,
                               scale=1.0 / math.sqrt(d_head))

    # TODO(synk): for very long sequences the full [B,H,LQ,LK] attention-weight
    # writeback dominates HBM traffic (inherent to the module's return API);
    # tile LK with an online softmax if the weights are not needed.
    return pl.pallas_call(
        kernel,
        grid=(B, pl.cdiv(LQ, tq)),
        in_specs=[
            pl.BlockSpec((None, tq, HD), lambda b, qi: (b, qi, 0)),   # Q tile
            pl.BlockSpec((None, LK, HD), lambda b, qi: (b, 0, 0)),    # K (resident per b)
            pl.BlockSpec((None, LK, HD), lambda b, qi: (b, 0, 0)),    # V (resident per b)
        ],
        out_specs=(
            pl.BlockSpec((None, tq, HD), lambda b, qi: (b, qi, 0)),           # out, [B,LQ,H*D]
            pl.BlockSpec((None, n_heads, tq, LK), lambda b, qi: (b, 0, qi, 0)),  # attn
        ),
        out_shape=(
            jax.ShapeDtypeStruct((B, LQ, HD), q.dtype),
            jax.ShapeDtypeStruct((B, n_heads, LQ, LK), q.dtype),
        ),
        compiler_params=pltpu.CompilerParams(
            dimension_semantics=("parallel", "parallel")),
    )(q, k, v)


# ----------------------------- Parameter construction --------------------------------

def _xavier_normal(key, fan_in, fan_out, gain=1.0):
    std = gain * math.sqrt(2.0 / (fan_in + fan_out))
    # stored as [in, out] so forward is x @ W (PyTorch stores [out, in], does x @ W.T)
    return std * jax.random.normal(key, (fan_in, fan_out), dtype=jnp.float32)


def _bias_uniform(key, fan_in, size):
    bound = 1.0 / math.sqrt(fan_in)
    return jax.random.uniform(key, (size,), dtype=jnp.float32, minval=-bound, maxval=bound)


def init_attention_layer_tsp(key, d_model_q, d_model_k, d_model_v, n_heads,
                             deep_initialization=1.0, d_output=None,
                             retain="min", low_rank=None):
    d_queries = d_model_q // n_heads
    d_keys = d_model_k // n_heads
    d_values = d_model_v // n_heads
    retain_fn = min if retain == "min" else max
    if (d_queries + d_keys + d_values) / 3.0 != d_queries:
        d_queries = retain_fn([d_queries, d_keys, d_values])
        d_keys = d_queries
        d_values = d_queries
    if low_rank is not None and low_rank != 0:
        d_queries = low_rank if low_rank < d_queries else d_queries
        d_keys = low_rank if low_rank < d_keys else d_keys
        d_values = low_rank if low_rank < d_values else d_values
    if d_output is None:
        d_output = d_model_q

    ks = jax.random.split(key, 8)
    params = {
        "Wq": _xavier_normal(ks[0], d_model_q, d_queries * n_heads, deep_initialization),
        "bq": _bias_uniform(ks[1], d_model_q, d_queries * n_heads),
        "Wk": _xavier_normal(ks[2], d_model_k, d_keys * n_heads, deep_initialization),
        "bk": _bias_uniform(ks[3], d_model_k, d_keys * n_heads),
        "Wv": _xavier_normal(ks[4], d_model_v, d_values * n_heads, deep_initialization),
        "bv": _bias_uniform(ks[5], d_model_v, d_values * n_heads),
        "Wo": _xavier_normal(ks[6], d_values * n_heads, d_output, deep_initialization),
        "bo": _bias_uniform(ks[7], d_values * n_heads, d_output),
        "n_heads": n_heads,
        "D": d_queries,
    }
    return params


# ----------------------------- Forward pass -------------------------------------------

def attention_layer_tsp_forward(params, queries, keys, values, attn_mask=None):
    # ATTN_NORM=False -> pre_norm{q,k,v} are Identity.
    # TODO(synk): attn_mask is accepted but ignored (inner attention here is the
    #             unmasked FullAttention, matching attn_mask=None usage).
    B, LQ, _ = queries.shape
    _, LK, _ = keys.shape
    _, LV, _ = values.shape
    H = params["n_heads"]
    D = params["D"]

    if queries is keys and keys is values:
        # Self-attention: fused QKV projection -> read the activation from HBM once.
        w_qkv = jnp.concatenate([params["Wq"], params["Wk"], params["Wv"]], axis=1)
        b_qkv = jnp.concatenate([params["bq"], params["bk"], params["bv"]])
        qkv = pallas_linear(queries.reshape(B * LQ, -1), w_qkv, b_qkv)
        nq = params["Wq"].shape[1]
        nk = params["Wk"].shape[1]
        q = qkv[:, :nq]
        k = qkv[:, nq:nq + nk]
        v = qkv[:, nq + nk:]
        LKp, LVp = LQ, LQ
    else:
        q = pallas_linear(queries.reshape(B * LQ, -1), params["Wq"], params["bq"])
        k = pallas_linear(keys.reshape(B * LK, -1), params["Wk"], params["bk"])
        v = pallas_linear(values.reshape(B * LV, -1), params["Wv"], params["bv"])
        LKp, LVp = LK, LV

    # Free last-dim splits only -- no transposes; attention consumes [B, L, H*D].
    q = q.reshape(B, LQ, H * D)
    k = k.reshape(B, LKp, H * D)
    v = v.reshape(B, LVp, H * D)

    out, attn = pallas_full_attention(q, k, v, H, D)      # [B,LQ,H*D], [B,H,LQ,LK]

    final = pallas_linear(out.reshape(B * LQ, -1), params["Wo"], params["bo"])
    final = final.reshape(B, LQ, -1)
    return final, attn


# ----------------------------- Pure-JAX reference -------------------------------------

def _reference_forward(params, queries, keys, values):
    B, LQ, _ = queries.shape
    _, LK, _ = keys.shape
    _, LV, _ = values.shape
    H = params["n_heads"]
    D = params["D"]
    q = (queries @ params["Wq"] + params["bq"]).reshape(B, LQ, H, D)
    k = (keys @ params["Wk"] + params["bk"]).reshape(B, LK, H, D)
    v = (values @ params["Wv"] + params["bv"]).reshape(B, LV, H, D)
    s = jnp.einsum("bqhd,bkhd->bhqk", q, k) / math.sqrt(D)
    p = jax.nn.softmax(s, axis=-1)
    o = jnp.einsum("bhqk,bkhd->bqhd", p, v).reshape(B, LQ, H * D)
    return o @ params["Wo"] + params["bo"], p


# ----------------------------- Main ----------------------------------------------------

if __name__ == "__main__":
    B, L = 2, 8
    d_model = 32
    n_heads = 4

    key = jax.random.PRNGKey(0)
    k_params, k_q, k_k, k_v = jax.random.split(key, 4)

    params = init_attention_layer_tsp(
        k_params, d_model_q=d_model, d_model_k=d_model, d_model_v=d_model,
        n_heads=n_heads, deep_initialization=1.0,
    )

    queries = jax.random.normal(k_q, (B, L, d_model), dtype=jnp.float32)
    keys = jax.random.normal(k_k, (B, L, d_model), dtype=jnp.float32)
    values = jax.random.normal(k_v, (B, L, d_model), dtype=jnp.float32)

    # Cross-attention path (separate Q/K/V projections).
    out, attn = attention_layer_tsp_forward(params, queries, keys, values, attn_mask=None)
    jax.block_until_ready((out, attn))
    assert out.shape == (B, L, d_model)
    assert attn.shape == (B, n_heads, L, L)

    ref_out, ref_attn = _reference_forward(params, queries, keys, values)
    # approx reciprocal in the softmax denominator -> slightly loose tolerance
    assert jnp.allclose(out, ref_out, atol=1e-2, rtol=1e-2)
    assert jnp.allclose(attn, ref_attn, atol=1e-2, rtol=1e-2)

    # Self-attention path (fused QKV projection).
    out2, attn2 = attention_layer_tsp_forward(params, queries, queries, queries)
    jax.block_until_ready((out2, attn2))
    ref_out2, ref_attn2 = _reference_forward(params, queries, queries, queries)
    assert jnp.allclose(out2, ref_out2, atol=1e-2, rtol=1e-2)
    assert jnp.allclose(attn2, ref_attn2, atol=1e-2, rtol=1e-2)

    print("KERNEL_OK")
</pallas_src>

<mosaic_0001>
module attributes {stable_mosaic.version = 11 : i64} {
  func.func @_linear_kernel(%arg0: i32, %arg1: memref<16x32xf32, #tpu.memory_space<vmem>>, %arg2: memref<32x32xf32, #tpu.memory_space<vmem>>, %arg3: memref<1x32xf32, #tpu.memory_space<vmem>>, %arg4: memref<16x32xf32, #tpu.memory_space<vmem>>) attributes {dimension_semantics = [#tpu.dimension_semantics<parallel>], iteration_bounds = array<i64: 1>, scalar_prefetch = 0 : i64, scratch_operands = 0 : i64, tpu.core_type = #tpu.core_type<tc>, window_params = [{transform_indices = @transform_0, window_bounds = array<i64: 16, 32>}, {pipeline_mode = #tpu.pipeline_mode<synchronous>, transform_indices = @transform_1, window_bounds = array<i64: 32, 32>}, {pipeline_mode = #tpu.pipeline_mode<synchronous>, transform_indices = @transform_2, window_bounds = array<i64: 1, 32>}, {transform_indices = @transform_3, window_bounds = array<i64: 16, 32>}]} {
    %c0 = arith.constant 0 : index
    %c0_0 = arith.constant 0 : index
    %0 = vector.load %arg1[%c0, %c0_0] : memref<16x32xf32, #tpu.memory_space<vmem>>, vector<16x32xf32>
    %c0_1 = arith.constant 0 : index
    %c0_2 = arith.constant 0 : index
    %1 = vector.load %arg2[%c0_1, %c0_2] : memref<32x32xf32, #tpu.memory_space<vmem>>, vector<32x32xf32>
    %cst = arith.constant dense<0.000000e+00> : vector<16x32xf32>
    %2 = tpu.matmul %0, %1, %cst {dimension_numbers = #tpu.dot_dimension_numbers<[1], [0], [0], [1], [0, 0, 1, 1], [], []>} : vector<16x32xf32>, vector<32x32xf32>, vector<16x32xf32> -> vector<16x32xf32>
    %c0_3 = arith.constant 0 : index
    %c0_4 = arith.constant 0 : index
    %3 = vector.load %arg3[%c0_3, %c0_4] : memref<1x32xf32, #tpu.memory_space<vmem>>, vector<1x32xf32>
    %4 = vector.broadcast %3 : vector<1x32xf32> to vector<16x32xf32>
    %5 = arith.addf %2, %4 : vector<16x32xf32>
    %c0_5 = arith.constant 0 : index
    %c0_6 = arith.constant 0 : index
    %6 = vector.load %arg4[%c0_5, %c0_6] : memref<16x32xf32, #tpu.memory_space<vmem>>, vector<16x32xf32>
    tpu.vector_store %arg4[%c0_5, %c0_6], %5 {strides = array<i32>} : memref<16x32xf32, #tpu.memory_space<vmem>>, vector<16x32xf32>,
    return
  }
  func.func @transform_0(%arg0: i32) -> (i32, i32) {
    %c0_i32 = arith.constant 0 : i32
    %c0_i32_0 = arith.constant 0 : i32
    return %arg0, %c0_i32 : i32, i32
  }
  func.func @transform_1(%arg0: i32) -> (i32, i32) {
    %c0_i32 = arith.constant 0 : i32
    %c0_i32_0 = arith.constant 0 : i32
    %c0_i32_1 = arith.constant 0 : i32
    return %c0_i32, %c0_i32_0 : i32, i32
  }
  func.func @transform_2(%arg0: i32) -> (i32, i32) {
    %c0_i32 = arith.constant 0 : i32
    %c0_i32_0 = arith.constant 0 : i32
    %c0_i32_1 = arith.constant 0 : i32
    return %c0_i32, %c0_i32_0 : i32, i32
  }
  func.func @transform_3(%arg0: i32) -> (i32, i32) {
    %c0_i32 = arith.constant 0 : i32
    %c0_i32_0 = arith.constant 0 : i32
    return %arg0, %c0_i32 : i32, i32
  }
}

</mosaic_0001>

<llo_original>
// kernel: tpu_custom_call.1
$region0: #{tpu_custom_call.1}
  #allocation0 [shape = 'u32[]', space=smem, size = 0x4, offset = 0x4, fixed_abs, tag = 'smem constant byte address 0x4 - core index']
  #allocation1 [shape = 'u32[144,128]{1,0:T(1,128)}', space=vmem, size = 0x12000, scoped, tag = 'internal scratch']
  %s0 = inlined_call_operand.hbm [shape: f32[16,32], index: 0, kind: input, shape index: {}]
  %s1 = inlined_call_operand.hbm [shape: f32[32,32], index: 1, kind: input, shape index: {}]
  %s2 = inlined_call_operand.vmem [shape: f32[1,32], index: 2, kind: input, shape index: {}]
  %s3 = inlined_call_operand.hbm [shape: f32[16,32], index: 3, kind: output, shape index: {}]
  %s4 = sld [smem:[#allocation0]]
  $region30: #{tpu_custom_call.1} parent=0
    _
  %s6 = ssub.s32 1, %s4
  %s7 = scalar_select 0, %s6, %s4
  $region1: #{tpu_custom_call.1} parent=0
    #allocation2 [shape = 'u8[8192]{0}', space=vmem, size = 0x2000, scoped, tag = 'input window, operand 0, single buffered']
    #allocation3 [shape = 's32[1]{0}', space=sflag, size = 0x4, scoped, tag = 'scoped memory for tpu_custom_call.1']
    #allocation4 [shape = 's32[1]{0}', space=sflag, size = 0x4, scoped, tag = 'scoped memory for tpu_custom_call.1']
    #allocation5 [shape = 'u8[16384]{0}', space=vmem, size = 0x4000, scoped, tag = 'input window, operand 1, single buffered']
    #allocation6 [shape = 's32[1]{0}', space=sflag, size = 0x4, scoped, tag = 'scoped memory for tpu_custom_call.1']
    #allocation7 [shape = 'u8[8192]{0}', space=vmem, size = 0x2000, scoped, tag = 'output window, operand 0, single buffered']
    %8 = vsyncpa [#allocation3], 0
    %9 = vsyncpa [#allocation6], 0
    %10 = vsyncpa [#allocation4], 0
    // Predicated region
    $region2: #{tpu_custom_call.1} parent=1 // pred_check
      _
    $region3: #{tpu_custom_call.1} parent=1 // pred_check_branch
      %12 = sbr.rel (0) target = $region5
    $region4: #{tpu_custom_call.1} parent=1 // pred_region
      %s14 = ssub.s32 256, 256
      %15 = vsyncadd [#allocation3], %s14
      %s16 = sshll.u32 [#allocation2], 4
      %s17 = int_to_ptr.vmem [resolvable:$true] %s16
      %22 = dma.hbm_to_vmem [thread:$0]  %s0, 256, %s17, [#allocation3], 128, 128, 8
    $region5: #{tpu_custom_call.1} parent=1 // pred_fallthru
      _
    // Predicated region
    $region6: #{tpu_custom_call.1} parent=1 // pred_check
      _
    $region7: #{tpu_custom_call.1} parent=1 // pred_check_branch
      %24 = sbr.rel (0) target = $region9
    $region8: #{tpu_custom_call.1} parent=1 // pred_region
      %s26 = ssub.s32 512, 512
      %27 = vsyncadd [#allocation6], %s26
      %s28 = sshll.u32 [#allocation5], 4
      %s29 = int_to_ptr.vmem [resolvable:$true] %s28
      %34 = dma.hbm_to_vmem [thread:$0]  %s1, 512, %s29, [#allocation6], 128, 128, 8
    $region9: #{tpu_custom_call.1} parent=1 // pred_fallthru
      _
    // Predicated region
    $region10: #{tpu_custom_call.1} parent=1 // pred_check
      _
    $region11: #{tpu_custom_call.1} parent=1 // pred_check_branch
      %36 = sbr.rel (0) target = $region13
    $region12: #{tpu_custom_call.1} parent=1 // pred_region
      _
    $region13: #{tpu_custom_call.1} parent=1 // pred_fallthru
      _
    // Predicated region
    $region14: #{tpu_custom_call.1} parent=1 // pred_check
      _
    $region15: #{tpu_custom_call.1} parent=1 // pred_check_branch
      %38 = sbr.rel (0) target = $region17
    $region16: #{tpu_custom_call.1} parent=1 // pred_region
      %39 = dma.done [#allocation3], 256
    $region17: #{tpu_custom_call.1} parent=1 // pred_fallthru
      _
    // Predicated region
    $region18: #{tpu_custom_call.1} parent=1 // pred_check
      _
    $region19: #{tpu_custom_call.1} parent=1 // pred_check_branch
      %41 = sbr.rel (0) target = $region21
    $region20: #{tpu_custom_call.1} parent=1 // pred_region
      %42 = dma.done [#allocation6], 512
    $region21: #{tpu_custom_call.1} parent=1 // pred_fallthru
      _
    %v43 = vld [vmem:[#allocation2] sm:$0xff]
    %v44 = vld [vmem:[#allocation2 + $0x8] sm:$0xff]
    %v45 = vld [vmem:[#allocation5] sm:$0xff]
    %v46 = vld [vmem:[#allocation5 + $0x8] sm:$0xff]
    %v47 = vld [vmem:[#allocation5 + $0x10] sm:$0xff]
    %v48 = vld [vmem:[#allocation5 + $0x18] sm:$0xff]
    %v49 = vld [vmem:[%s2] sm:$0x1]
    %v51 = vlaneseq
    %v52 = vshrl.u32 %v51, 7
    %v53 = vsub.s32 0, %v52
    %v54 = vrot.slane %v49, %v53
    %vm56 = vcmask 261120
    %v58 = vsel %vm56, %v43, 0
    %v61 = vsel %vm56, %v44, 0
    %63 = vmatprep.subr.mxu0 0.0
    %64 = vmatpush1.msra.mxu0 %v45
    %65 = vmatprep.subr.mxu0 0.0
    %66 = vmatpush1.msra.mxu0 %v46
    %67 = vmatprep.subr.mxu0 0.0
    %68 = vmatpush1.msra.mxu0 %v47
    %69 = vmatprep.subr.mxu0 0.0
    %70 = vmatpush1.msra.mxu0 %v48
    %71 = vmatprep.subr.mxu0 0.0
    %72 = vmatpush1.msra.mxu0 0.0
    %73 = vmatprep.subr.mxu0 0.0
    %74 = vmatpush1.msra.mxu0 0.0
    %75 = vmatprep.subr.mxu0 0.0
    %76 = vmatpush1.msra.mxu0 0.0
    %77 = vmatprep.subr.mxu0 0.0
    %78 = vmatpush1.msra.mxu0 0.0
    %79 = vmatprep.subr.mxu0 0.0
    %80 = vmatpush1.msra.mxu0 0.0
    %81 = vmatprep.subr.mxu0 0.0
    %82 = vmatpush1.msra.mxu0 0.0
    %83 = vmatprep.subr.mxu0 0.0
    %84 = vmatpush1.msra.mxu0 0.0
    %85 = vmatprep.subr.mxu0 0.0
    %86 = vmatpush1.msra.mxu0 0.0
    %87 = vmatprep.subr.mxu0 0.0
    %88 = vmatpush1.msra.mxu0 0.0
    %89 = vmatprep.subr.mxu0 0.0
    %90 = vmatpush1.msra.mxu0 0.0
    %91 = vmatprep.subr.mxu0 0.0
    %92 = vmatpush1.msra.mxu0 0.0
    %93 = vmatprep.subr.mxu0 0.0
    %94 = vmatpush1.msra.mxu0 0.0
    %95 = vmatprep.subr.mxu0 0.0
    %96 = vmatpush1.msra.mxu0 0.0
    %97 = vmatprep.subr.mxu0 0.0
    %98 = vmatpush1.msra.mxu0 0.0
    %99 = vmatprep.subr.mxu0 0.0
    %100 = vmatpush1.msra.mxu0 0.0
    %101 = vmatprep.subr.mxu0 0.0
    %102 = vmatpush1.msra.mxu0 0.0
    %103 = vmatprep.subr.mxu0 0.0
    %104 = vmatpush1.msra.mxu0 0.0
    %105 = vmatprep.subr.mxu0 0.0
    %106 = vmatpush1.msra.mxu0 0.0
    %107 = vmatprep.subr.mxu0 0.0
    %108 = vmatpush1.msra.mxu0 0.0
    %109 = vmatprep.subr.mxu0 0.0
    %110 = vmatpush1.msra.mxu0 0.0
    %111 = vmatprep.subr.mxu0 0.0
    %112 = vmatpush1.msra.mxu0 0.0
    %113 = vmatprep.subr.mxu0 0.0
    %114 = vmatpush1.msra.mxu0 0.0
    %115 = vmatprep.subr.mxu0 0.0
    %116 = vmatpush1.msra.mxu0 0.0
    %117 = vmatprep.subr.mxu0 0.0
    %118 = vmatpush1.msra.mxu0 0.0
    %119 = vmatprep.subr.mxu0 0.0
    %120 = vmatpush1.msra.mxu0 0.0
    %121 = vmatprep.subr.mxu0 0.0
    %122 = vmatpush1.msra.mxu0 0.0
    %123 = vmatprep.subr.mxu0 0.0
    %124 = vmatpush1.msra.mxu0 0.0
    %125 = vmatprep.subr.mxu0 0.0
    %126 = vmatpush1.msra.mxu0 0.0
    %127 = vmatprep.mubr.f32.mxu0 0.0
    %128 = vmatmul.mubr.f32.gmra.mrb[0].mxu0 %v58
    %v129 = vpop.f32.mrb[0].mxu0
    %v130 = vadd.f32 %v54, %v129
    %v131 = vpop.f32.mrb[0].mxu0
    %132 = vmatprep.mubr.f32.mxu0 0.0
    %133 = vmatmul.mubr.f32.gmra.mrb[0].mxu0 %v61
    %v134 = vpop.f32.mrb[0].mxu0
    %v135 = vadd.f32 %v54, %v134
    %v136 = vpop.f32.mrb[0].mxu0
    %137 = vdwg.mxu0
    %138 = vst.msk [vmem:[#allocation7] sm:$0xff] %vm56, %v130
    %139 = vst.msk [vmem:[#allocation7 + $0x8] sm:$0xff] %vm56, %v135
    // Predicated region
    $region22: #{tpu_custom_call.1} parent=1 // pred_check
      _
    $region23: #{tpu_custom_call.1} parent=1 // pred_check_branch
      %141 = sbr.rel (0) target = $region25
    $region24: #{tpu_custom_call.1} parent=1 // pred_region
      %s143 = ssub.s32 256, 256
      %144 = vsyncadd [#allocation4], %s143
      %s145 = sshll.u32 [#allocation7], 4
      %s146 = int_to_ptr.vmem [resolvable:$true] %s145
      %151 = dma.vmem_to_hbm [thread:$0]  %s146, 256, %s3, [#allocation4], 128, 128, 8
    $region25: #{tpu_custom_call.1} parent=1 // pred_fallthru
      _
    // Predicated region
    $region26: #{tpu_custom_call.1} parent=1 // pred_check
      _
    $region27: #{tpu_custom_call.1} parent=1 // pred_check_branch
      %153 = sbr.rel (0) target = $region29
    $region28: #{tpu_custom_call.1} parent=1 // pred_region
      %154 = dma.done [#allocation4], 256
    $region29: #{tpu_custom_call.1} parent=1 // pred_fallthru
      _
    %155 = vsyncpa [#allocation3], 1
    %156 = vsyncpa [#allocation6], 1
    %157 = vsyncpa [#allocation4], 1

</llo_original>
